<compile_context>
chip_gen: v7x
topology: tpu7x:2x2x1
jax: 0.10.0
libtpu: 0.0.40
codegen_flags: <defaults>
</compile_context>

<pallas_src>
import jax
import jax.numpy as jnp
from jax.experimental import pallas as pl
from jax.experimental.pallas import tpu as pltpu

_BLOCK_BYTES = 2 * 1024 * 1024   # target per-input block (~85% of HBM roofline)
_FOLD_BYTES = 2 * 1024 * 1024    # fold batch into one block below this size
_MAX_LANES = 1024


def _sum_two_kernel(a_ref, b_ref, o_ref):
    # a_ref = x[:, 0] tile, b_ref = x[:, 5] tile. Pure VPU elementwise add.
    o_ref[...] = a_ref[...] + b_ref[...]


def _lane_factor(n):
    """Largest multiple-of-128 divisor of n, capped at _MAX_LANES (0 if none)."""
    for lanes in range(_MAX_LANES, 127, -128):
        if n % lanes == 0:
            return lanes
    return 0


def _row_tile(rows, lanes, itemsize, sub, force_split):
    """Row tile: a divisor of `rows`, a multiple of `sub` sublanes when it is
    not the full extent, sized for ~_BLOCK_BYTES per input block."""
    cap = max(sub, _BLOCK_BYTES // (lanes * itemsize))
    tr = rows
    while tr > cap and tr % 2 == 0 and (tr // 2) % sub == 0:
        tr //= 2
    if force_split and tr == rows and tr % 2 == 0 and (tr // 2) % sub == 0:
        # v7x: guarantee >= 2 grid steps along a parallel axis when B == 1 so
        # both TensorCores participate (harmless on single-TC v5e/v6e).
        tr //= 2
    return tr


def _call_channel_select(x2, rows, lanes):
    """Fast path: x2 is (B, C, rows, lanes); DMA only channels 0 and 5."""
    B = x2.shape[0]
    itemsize = jnp.dtype(x2.dtype).itemsize
    sub = max(8, 32 // itemsize)            # f32 -> 8, bf16 -> 16, int8/fp8 -> 32
    out_shape = jax.ShapeDtypeStruct((B, rows, lanes), x2.dtype)

    if B * rows * lanes * itemsize <= _FOLD_BYTES:
        # Tiny problem: one block covering every batch. A single strided DMA
        # per input swamps the ~0.35 us per-grid-step overhead.
        # NOTE: the channel dim is a Squeezed (size-1) block, so the block
        # index returned by the index_map *is* the channel index (0 and 5).
        in_specs = [
            pl.BlockSpec((B, pl.Squeezed(), rows, lanes), lambda i: (0, 0, 0, 0)),
            pl.BlockSpec((B, pl.Squeezed(), rows, lanes), lambda i: (0, 5, 0, 0)),
        ]
        out_specs = pl.BlockSpec((B, rows, lanes), lambda i: (0, 0, 0))
        grid = (1,)
        sem = ("arbitrary",)
    else:
        tr = _row_tile(rows, lanes, itemsize, sub, force_split=(B == 1))
        in_specs = [
            pl.BlockSpec((pl.Squeezed(), pl.Squeezed(), tr, lanes),
                         lambda b, r: (b, 0, r, 0)),
            pl.BlockSpec((pl.Squeezed(), pl.Squeezed(), tr, lanes),
                         lambda b, r: (b, 5, r, 0)),
        ]
        out_specs = pl.BlockSpec((pl.Squeezed(), tr, lanes), lambda b, r: (b, r, 0))
        grid = (B, rows // tr)
        sem = ("parallel", "parallel")

    return pl.pallas_call(
        _sum_two_kernel,
        out_shape=out_shape,
        grid=grid,
        in_specs=in_specs,
        out_specs=out_specs,
        compiler_params=pltpu.CompilerParams(dimension_semantics=sem),
    )(x2, x2)  # x passed twice: one channel-selecting pipeline per input


def _call_padded(a3, b3):
    """Fallback path: a3/b3 are pre-sliced, lane-padded (B, rows, lanes)."""
    B, rows, lanes = a3.shape
    itemsize = jnp.dtype(a3.dtype).itemsize
    sub = max(8, 32 // itemsize)
    out_shape = jax.ShapeDtypeStruct((B, rows, lanes), a3.dtype)

    if B * rows * lanes * itemsize <= _FOLD_BYTES:
        spec = pl.BlockSpec((B, rows, lanes), lambda i: (0, 0, 0))
        in_specs, out_specs = [spec, spec], spec
        grid = (1,)
        sem = ("arbitrary",)
    else:
        tr = _row_tile(rows, lanes, itemsize, sub, force_split=(B == 1))
        spec = pl.BlockSpec((pl.Squeezed(), tr, lanes), lambda b, r: (b, r, 0))
        in_specs, out_specs = [spec, spec], spec
        grid = (B, rows // tr)
        sem = ("parallel", "parallel")

    return pl.pallas_call(
        _sum_two_kernel,
        out_shape=out_shape,
        grid=grid,
        in_specs=in_specs,
        out_specs=out_specs,
        compiler_params=pltpu.CompilerParams(dimension_semantics=sem),
    )(a3, b3)


def sum_module_forward(x, weight=None):
    """Pallas equivalent of Sum.forward: x[:, 0] + x[:, 5].

    x: (B, C, H, W) with C >= 6. Returns (B, H, W), same dtype as x.
    `weight` is accepted (and ignored) to mirror the PyTorch module's state.
    """
    B, C, H, W = x.shape
    assert C >= 6, "channel dim must be >= 6 for x[:, 5]"
    N = H * W

    lanes = _lane_factor(N)
    if lanes:
        # No copies: DMA only channels 0 and 5 straight out of x via
        # channel-selecting BlockSpecs on a lane-dense (rows, lanes) layout.
        rows = N // lanes
        x2 = x.reshape(B, C, rows, lanes)          # free, contiguous reshape
        out = _call_channel_select(x2, rows, lanes)
        return out.reshape(B, H, W)

    # H*W not a multiple of 128 (e.g. 15x15, 7x7 feature maps): slice out the
    # two needed channels and pad the flattened spatial axis to a 128-lane
    # multiple so stores stay unmasked (masked vst.msk is ~4.5x slower). The
    # slice+pad copies only 2/C of the input once.
    lanes = 128
    n_pad = (-N) % lanes
    rows = (N + n_pad) // lanes
    a = x[:, 0].reshape(B, N)
    b = x[:, 5].reshape(B, N)
    if n_pad:
        a = jnp.pad(a, ((0, 0), (0, n_pad)))
        b = jnp.pad(b, ((0, 0), (0, n_pad)))
    out = _call_padded(a.reshape(B, rows, lanes), b.reshape(B, rows, lanes))
    return out.reshape(B, rows * lanes)[:, :N].reshape(B, H, W)


if __name__ == "__main__":
    key = jax.random.PRNGKey(0)
    B, C, H, W = 2, 8, 16, 16  # C >= 6 required by x[:, 5]
    x = jax.random.normal(key, (B, C, H, W), dtype=jnp.float32)

    # Deterministic parameter init matching the module: weight = [1.0] (unused).
    weight = jnp.array([1.0], dtype=jnp.float32)

    out = jax.block_until_ready(sum_module_forward(x, weight))
    ref = x[:, 0] + x[:, 5]
    assert out.shape == (B, H, W)
    assert jnp.allclose(out, ref, atol=1e-6), "mismatch vs reference"

    # Also exercise the non-multiple-of-128 fallback (padded lane-dense path).
    x_odd = jax.random.normal(key, (B, C, 15, 15), dtype=jnp.float32)
    out_odd = jax.block_until_ready(sum_module_forward(x_odd, weight))
    assert jnp.allclose(out_odd, x_odd[:, 0] + x_odd[:, 5], atol=1e-6), \
        "mismatch vs reference (padded path)"

    print("KERNEL_OK")
</pallas_src>

<mosaic_0001>
module attributes {stable_mosaic.version = 11 : i64} {
  func.func @_sum_two_kernel(%arg0: i32, %arg1: memref<2x1x1x256xf32, #tpu.memory_space<vmem>>, %arg2: memref<2x1x1x256xf32, #tpu.memory_space<vmem>>, %arg3: memref<2x1x256xf32, #tpu.memory_space<vmem>>) attributes {dimension_semantics = [#tpu.dimension_semantics<arbitrary>], iteration_bounds = array<i64: 1>, scalar_prefetch = 0 : i64, scratch_operands = 0 : i64, tpu.core_type = #tpu.core_type<tc>, window_params = [{transform_indices = @transform_0, window_bounds = array<i64: 2, 1, 1, 256>}, {transform_indices = @transform_1, window_bounds = array<i64: 2, 1, 1, 256>}, {pipeline_mode = #tpu.pipeline_mode<synchronous>, transform_indices = @transform_2, window_bounds = array<i64: 2, 1, 256>}]} {
    %c0 = arith.constant 0 : index
    %c0_0 = arith.constant 0 : index
    %c0_1 = arith.constant 0 : index
    %c0_2 = arith.constant 0 : index
    %0 = vector.load %arg1[%c0, %c0_0, %c0_1, %c0_2] : memref<2x1x1x256xf32, #tpu.memory_space<vmem>>, vector<2x1x1x256xf32>
    %1 = vector.shape_cast %0 : vector<2x1x1x256xf32> to vector<2x1x256xf32>
    %c0_3 = arith.constant 0 : index
    %c0_4 = arith.constant 0 : index
    %c0_5 = arith.constant 0 : index
    %c0_6 = arith.constant 0 : index
    %2 = vector.load %arg2[%c0_3, %c0_4, %c0_5, %c0_6] : memref<2x1x1x256xf32, #tpu.memory_space<vmem>>, vector<2x1x1x256xf32>
    %3 = vector.shape_cast %2 : vector<2x1x1x256xf32> to vector<2x1x256xf32>
    %4 = arith.addf %1, %3 : vector<2x1x256xf32>
    %c0_7 = arith.constant 0 : index
    %c0_8 = arith.constant 0 : index
    %c0_9 = arith.constant 0 : index
    %5 = vector.load %arg3[%c0_7, %c0_8, %c0_9] : memref<2x1x256xf32, #tpu.memory_space<vmem>>, vector<2x1x256xf32>
    tpu.vector_store %arg3[%c0_7, %c0_8, %c0_9], %4 {strides = array<i32>} : memref<2x1x256xf32, #tpu.memory_space<vmem>>, vector<2x1x256xf32>,
    return
  }
  func.func @transform_0(%arg0: i32) -> (i32, i32, i32, i32) {
    %c0_i32 = arith.constant 0 : i32
    %c0_i32_0 = arith.constant 0 : i32
    %c0_i32_1 = arith.constant 0 : i32
    %c0_i32_2 = arith.constant 0 : i32
    %c0_i32_3 = arith.constant 0 : i32
    return %c0_i32, %c0_i32_0, %c0_i32_1, %c0_i32_2 : i32, i32, i32, i32
  }
  func.func @transform_1(%arg0: i32) -> (i32, i32, i32, i32) {
    %c0_i32 = arith.constant 0 : i32
    %c5_i32 = arith.constant 5 : i32
    %c0_i32_0 = arith.constant 0 : i32
    %c0_i32_1 = arith.constant 0 : i32
    %c0_i32_2 = arith.constant 0 : i32
    return %c0_i32, %c5_i32, %c0_i32_0, %c0_i32_1 : i32, i32, i32, i32
  }
  func.func @transform_2(%arg0: i32) -> (i32, i32, i32) {
    %c0_i32 = arith.constant 0 : i32
    %c0_i32_0 = arith.constant 0 : i32
    %c0_i32_1 = arith.constant 0 : i32
    %c0_i32_2 = arith.constant 0 : i32
    return %c0_i32, %c0_i32_0, %c0_i32_1 : i32, i32, i32
  }
}

</mosaic_0001>

<llo_original>
// kernel: tpu_custom_call.1
$region0: #{tpu_custom_call.1}
  #allocation0 [shape = 'u32[]', space=smem, size = 0x4, offset = 0x4, fixed_abs, tag = 'smem constant byte address 0x4 - core index']
  #allocation1 [shape = 'u32[144,128]{1,0:T(1,128)}', space=vmem, size = 0x12000, scoped, tag = 'internal scratch']
  %s0 = inlined_call_operand.hbm [shape: f32[2,8,1,256], index: 0, kind: input, shape index: {}]
  %s1 = inlined_call_operand.hbm [shape: f32[2,8,1,256], index: 1, kind: input, shape index: {}]
  %s2 = inlined_call_operand.hbm [shape: f32[2,1,256], index: 2, kind: output, shape index: {}]
  %s3 = sld [smem:[#allocation0]]
  $region26: #{tpu_custom_call.1} parent=0
    _
  %s5 = ssub.s32 1, %s3
  %s6 = scalar_select 0, %s5, %s3
  $region1: #{tpu_custom_call.1} parent=0
    #allocation2 [shape = 'u8[2048]{0}', space=vmem, size = 0x800, scoped, tag = 'input window, operand 0, single buffered']
    #allocation3 [shape = 's32[1]{0}', space=sflag, size = 0x4, scoped, tag = 'scoped memory for tpu_custom_call.1']
    #allocation4 [shape = 's32[1]{0}', space=sflag, size = 0x4, scoped, tag = 'scoped memory for tpu_custom_call.1']
    #allocation5 [shape = 'u8[2048]{0}', space=vmem, size = 0x800, scoped, tag = 'input window, operand 1, single buffered']
    #allocation6 [shape = 's32[1]{0}', space=sflag, size = 0x4, scoped, tag = 'scoped memory for tpu_custom_call.1']
    #allocation7 [shape = 'u8[2048]{0}', space=vmem, size = 0x800, scoped, tag = 'output window, operand 0, single buffered']
    %7 = vsyncpa [#allocation3], 0
    %8 = vsyncpa [#allocation6], 0
    %9 = vsyncpa [#allocation4], 0
    // Predicated region
    $region2: #{tpu_custom_call.1} parent=1 // pred_check
      _
    $region3: #{tpu_custom_call.1} parent=1 // pred_check_branch
      %11 = sbr.rel (0) target = $region5
    $region4: #{tpu_custom_call.1} parent=1 // pred_region
      %s13 = ssub.s32 64, 64
      %14 = vsyncadd [#allocation3], %s13
      %s15 = sshll.u32 [#allocation2], 4
      %s16 = int_to_ptr.vmem [resolvable:$true] %s15
      %21 = dma.hbm_to_vmem [thread:$0]  %s0, 64, %s16, [#allocation3], 256, 32, 2
    $region5: #{tpu_custom_call.1} parent=1 // pred_fallthru
      _
    // Predicated region
    $region6: #{tpu_custom_call.1} parent=1 // pred_check
      _
    $region7: #{tpu_custom_call.1} parent=1 // pred_check_branch
      %23 = sbr.rel (0) target = $region9
    $region8: #{tpu_custom_call.1} parent=1 // pred_region
      %s25 = ssub.s32 64, 64
      %26 = vsyncadd [#allocation6], %s25
      %s27 = scalar_lea.hbm %s1, 160
      %s28 = sshll.u32 [#allocation5], 4
      %s29 = int_to_ptr.vmem [resolvable:$true] %s28
      %34 = dma.hbm_to_vmem [thread:$0]  %s27, 64, %s29, [#allocation6], 256, 32, 2
    $region9: #{tpu_custom_call.1} parent=1 // pred_fallthru
      _
    // Predicated region
    $region10: #{tpu_custom_call.1} parent=1 // pred_check
      _
    $region11: #{tpu_custom_call.1} parent=1 // pred_check_branch
      %36 = sbr.rel (0) target = $region13
    $region12: #{tpu_custom_call.1} parent=1 // pred_region
      %37 = dma.done [#allocation3], 64
    $region13: #{tpu_custom_call.1} parent=1 // pred_fallthru
      _
    // Predicated region
    $region14: #{tpu_custom_call.1} parent=1 // pred_check
      _
    $region15: #{tpu_custom_call.1} parent=1 // pred_check_branch
      %39 = sbr.rel (0) target = $region17
    $region16: #{tpu_custom_call.1} parent=1 // pred_region
      %40 = dma.done [#allocation6], 64
    $region17: #{tpu_custom_call.1} parent=1 // pred_fallthru
      _
    %v41 = vld [vmem:[#allocation2] sm:$0x3]
    %v42 = vld [vmem:[#allocation2 + $0x2] sm:$0x3]
    %v43 = vld [vmem:[#allocation5] sm:$0x3]
    %v44 = vld [vmem:[#allocation5 + $0x2] sm:$0x3]
    %v45 = vadd.f32 %v41, %v43
    %v46 = vadd.f32 %v42, %v44
    %v47 = vlaneseq
    %vm48 = vcmp.ge.s32.totalorder %v47, 0
    %vm49 = vcmp.lt.s32.totalorder %v47, 256
    %vm50 = vmand %vm48, %vm49
    %51 = vst.msk [vmem:[#allocation7] sm:$0x3] %vm50, %v45
    %52 = vst.msk [vmem:[#allocation7 + $0x2] sm:$0x3] %vm50, %v46
    // Predicated region
    $region18: #{tpu_custom_call.1} parent=1 // pred_check
      _
    $region19: #{tpu_custom_call.1} parent=1 // pred_check_branch
      %54 = sbr.rel (0) target = $region21
    $region20: #{tpu_custom_call.1} parent=1 // pred_region
      %s56 = ssub.s32 64, 64
      %57 = vsyncadd [#allocation4], %s56
      %s58 = sshll.u32 [#allocation7], 4
      %s59 = int_to_ptr.vmem [resolvable:$true] %s58
      %64 = dma.vmem_to_hbm [thread:$0]  %s59, 64, %s2, [#allocation4], 32, 32, 2
    $region21: #{tpu_custom_call.1} parent=1 // pred_fallthru
      _
    // Predicated region
    $region22: #{tpu_custom_call.1} parent=1 // pred_check
      _
    $region23: #{tpu_custom_call.1} parent=1 // pred_check_branch
      %66 = sbr.rel (0) target = $region25
    $region24: #{tpu_custom_call.1} parent=1 // pred_region
      %67 = dma.done [#allocation4], 64
    $region25: #{tpu_custom_call.1} parent=1 // pred_fallthru
      _
    %68 = vsyncpa [#allocation3], 1
    %69 = vsyncpa [#allocation6], 1
    %70 = vsyncpa [#allocation4], 1

</llo_original>
